<compile_context>
chip_gen: v7x
topology: tpu7x:2x2x1
jax: 0.10.0
libtpu: 0.0.40
codegen_flags: <defaults>
</compile_context>

<pallas_src>
import math

import jax
import jax.numpy as jnp
from jax.experimental import pallas as pl
from jax.experimental.pallas import tpu as pltpu

LANE = 128
SUBLANE = 8


def _round_up(x, m):
    return ((x + m - 1) // m) * m


# ----------------------------------------------------------------------------
# Kernels (actor head + critic fused; all out-feature dims lane-padded to 128)
# ----------------------------------------------------------------------------
def _mlp_actor_critic_kernel(x_ref, w1_ref, b1_ref, w2_ref, b2_ref,
                             w3_ref, b3_ref, wc_ref, bc_ref,
                             logits_ref, value_ref):
    """Vector-obs branch: Linear->Tanh->Linear->Tanh->Linear (actor) + Linear (critic)."""
    x = x_ref[...]
    h1 = jnp.tanh(
        jnp.dot(x.astype(w1_ref.dtype), w1_ref[...],
                preferred_element_type=jnp.float32) + b1_ref[...])
    h2 = jnp.tanh(
        jnp.dot(h1.astype(w2_ref.dtype), w2_ref[...],
                preferred_element_type=jnp.float32) + b2_ref[...])
    logits = (jnp.dot(h2.astype(w3_ref.dtype), w3_ref[...],
                      preferred_element_type=jnp.float32) + b3_ref[...])
    value = (jnp.dot(x.astype(wc_ref.dtype), wc_ref[...],
                     preferred_element_type=jnp.float32) + bc_ref[...])
    logits_ref[...] = logits.astype(logits_ref.dtype)
    value_ref[...] = value.astype(value_ref.dtype)


def _linear_actor_critic_kernel(x_ref, w_ref, b_ref, wc_ref, bc_ref,
                                logits_ref, value_ref):
    """Image-obs branch: single Linear actor head + Linear critic."""
    x = x_ref[...]
    logits = (jnp.dot(x.astype(w_ref.dtype), w_ref[...],
                      preferred_element_type=jnp.float32) + b_ref[...])
    value = (jnp.dot(x.astype(wc_ref.dtype), wc_ref[...],
                     preferred_element_type=jnp.float32) + bc_ref[...])
    logits_ref[...] = logits.astype(logits_ref.dtype)
    value_ref[...] = value.astype(value_ref.dtype)


# ----------------------------------------------------------------------------
# Module wrapper
# ----------------------------------------------------------------------------
class DistributedActorCriticPallas:
    """JAX/Pallas port of the rllte DistributedActorCritic head (actor + critic).

    __call__ takes the concatenated feature vector ("lstm_output",
    width feature_dim + action_dim + 1) and returns (policy_head, baseline).
    """

    def __init__(self, obs_shape, action_dim, feature_dim, hidden_dim, key,
                 action_type="Discrete", use_bf16_matmul=False,
                 block_batch=256):
        self.obs_shape = tuple(obs_shape)
        self.action_dim = action_dim
        self.hidden_dim = hidden_dim
        self.action_type = action_type
        self.is_image_obs = len(self.obs_shape) > 1
        self.in_dim = feature_dim + action_dim + 1          # lstm_output_size
        self.block_batch = _round_up(max(block_batch, SUBLANE), SUBLANE)
        self.mat_dtype = jnp.bfloat16 if use_bf16_matmul else jnp.float32

        # Lane-padded output widths.
        self.Hp = _round_up(hidden_dim, LANE)
        self.Ap = _round_up(action_dim, LANE)
        self.Vp = LANE                                       # critic out (1 -> 128)

        def init_linear(k, fan_in, fan_out, rows, cols):
            # nn.Linear-like uniform(+/- 1/sqrt(fan_in)); zero-padded to (rows, cols).
            kw, kb = jax.random.split(k)
            bound = 1.0 / math.sqrt(fan_in)
            w = jnp.zeros((rows, cols), jnp.float32)
            w = w.at[:fan_in, :fan_out].set(
                jax.random.uniform(kw, (fan_in, fan_out), jnp.float32, -bound, bound))
            b = jnp.zeros((1, cols), jnp.float32)
            b = b.at[:, :fan_out].set(
                jax.random.uniform(kb, (1, fan_out), jnp.float32, -bound, bound))
            return w.astype(self.mat_dtype), b               # biases stay f32

        kc, ka = jax.random.split(key)
        # Critic: Linear(in_dim, 1), out-padded to 128 lanes.
        self.wc, self.bc = init_linear(kc, self.in_dim, 1, self.in_dim, self.Vp)

        if self.is_image_obs:
            self.w, self.b = init_linear(ka, self.in_dim, action_dim,
                                         self.in_dim, self.Ap)
        else:
            k1, k2, k3 = jax.random.split(ka, 3)
            self.w1, self.b1 = init_linear(k1, self.in_dim, hidden_dim,
                                           self.in_dim, self.Hp)
            self.w2, self.b2 = init_linear(k2, hidden_dim, hidden_dim,
                                           self.Hp, self.Hp)
            self.w3, self.b3 = init_linear(k3, hidden_dim, action_dim,
                                           self.Hp, self.Ap)

        if action_type == "Box":
            self.actor_logstd = jnp.ones((1, action_dim), jnp.float32)

    # ------------------------------------------------------------------ call
    def __call__(self, x):
        """x: [B, in_dim] f32 -> (actor_out [B, action_dim], baseline [B, 1])."""
        B, F = x.shape
        assert F == self.in_dim, (F, self.in_dim)

        TB = min(self.block_batch, _round_up(B, SUBLANE))
        Bp = _round_up(B, TB)
        if Bp != B:
            x = jnp.pad(x, ((0, Bp - B), (0, 0)))
        nb = Bp // TB

        x_spec = pl.BlockSpec((TB, F), lambda i: (i, 0))

        def w_spec(arr):
            # Whole parameter resident in VMEM, same block for every grid step.
            return pl.BlockSpec(arr.shape, lambda i: (0, 0))

        out_specs = (
            pl.BlockSpec((TB, self.Ap), lambda i: (i, 0)),
            pl.BlockSpec((TB, self.Vp), lambda i: (i, 0)),
        )
        out_shape = (
            jax.ShapeDtypeStruct((Bp, self.Ap), jnp.float32),
            jax.ShapeDtypeStruct((Bp, self.Vp), jnp.float32),
        )
        compiler_params = pltpu.CompilerParams(
            dimension_semantics=("parallel",))

        if self.is_image_obs:
            kernel = _linear_actor_critic_kernel
            params = (self.w, self.b, self.wc, self.bc)
        else:
            kernel = _mlp_actor_critic_kernel
            params = (self.w1, self.b1, self.w2, self.b2,
                      self.w3, self.b3, self.wc, self.bc)

        logits_p, value_p = pl.pallas_call(
            kernel,
            out_shape=out_shape,
            grid=(nb,),
            in_specs=[x_spec] + [w_spec(p) for p in params],
            out_specs=out_specs,
            compiler_params=compiler_params,
        )(x, *params)

        # Padded lanes / padded batch rows never feed downstream: slice here.
        actor_out = logits_p[:B, :self.action_dim]
        baseline = value_p[:B, :1]
        return actor_out, baseline

    def get_policy_outputs(self, x):
        actor_out, _ = self(x)
        if self.action_type == "Box":
            std = jnp.broadcast_to(jnp.exp(self.actor_logstd), actor_out.shape)
            return (actor_out, std)
        return (actor_out,)

    # ------------------------------------------------------- pure-JAX reference
    def reference(self, x):
        """Uses the *unpadded* logical parameter slices -> also validates padding."""
        ad, hd = self.action_dim, self.hidden_dim

        def lin(h, w, b, n_in, n_out):
            hm = h[:, :n_in].astype(w.dtype)
            return (jnp.dot(hm, w[:n_in, :n_out],
                            preferred_element_type=jnp.float32) + b[:, :n_out])

        if self.is_image_obs:
            actor_out = lin(x, self.w, self.b, self.in_dim, ad)
        else:
            h1 = jnp.tanh(lin(x, self.w1, self.b1, self.in_dim, hd))
            h2 = jnp.tanh(lin(h1, self.w2, self.b2, hd, hd))
            actor_out = lin(h2, self.w3, self.b3, hd, ad)
        baseline = lin(x, self.wc, self.bc, self.in_dim, 1)
        return actor_out, baseline


# ----------------------------------------------------------------------------
# Main
# ----------------------------------------------------------------------------
if __name__ == "__main__":
    key = jax.random.PRNGKey(0)
    k_vec, k_img, k_box, k_obs1, k_obs2, k_obs3 = jax.random.split(key, 6)

    feature_dim = 32
    hidden_dim = 32
    action_dim = 8
    in_dim = feature_dim + action_dim + 1  # lstm_output_size = 41

    # --- 1) Discrete, vector obs, f32, multi-block batch grid (24 rows / TB=8) ---
    ac_vec = DistributedActorCriticPallas(
        obs_shape=(feature_dim,), action_dim=action_dim,
        feature_dim=feature_dim, hidden_dim=hidden_dim, key=k_vec,
        action_type="Discrete", use_bf16_matmul=False, block_batch=8)
    x1 = jax.random.normal(k_obs1, (24, in_dim), jnp.float32)
    logits1, base1 = ac_vec(x1)
    jax.block_until_ready((logits1, base1))
    r_logits1, r_base1 = ac_vec.reference(x1)
    assert logits1.shape == (24, action_dim) and base1.shape == (24, 1)
    assert jnp.allclose(logits1, r_logits1, atol=1e-5, rtol=1e-5)
    assert jnp.allclose(base1, r_base1, atol=1e-5, rtol=1e-5)

    # --- 2) Discrete, image obs (single Linear actor), non-multiple-of-8 batch ---
    ac_img = DistributedActorCriticPallas(
        obs_shape=(4, 16, 16), action_dim=action_dim,
        feature_dim=feature_dim, hidden_dim=hidden_dim, key=k_img,
        action_type="Discrete", use_bf16_matmul=False, block_batch=256)
    x2 = jax.random.normal(k_obs2, (6, in_dim), jnp.float32)
    logits2, base2 = ac_img(x2)
    jax.block_until_ready((logits2, base2))
    r_logits2, r_base2 = ac_img.reference(x2)
    assert logits2.shape == (6, action_dim) and base2.shape == (6, 1)
    assert jnp.allclose(logits2, r_logits2, atol=1e-5, rtol=1e-5)
    assert jnp.allclose(base2, r_base2, atol=1e-5, rtol=1e-5)

    # --- 3) Box, vector obs, bf16 matmul inputs (f32 accumulation / tanh) ---
    ac_box = DistributedActorCriticPallas(
        obs_shape=(feature_dim,), action_dim=action_dim,
        feature_dim=feature_dim, hidden_dim=hidden_dim, key=k_box,
        action_type="Box", use_bf16_matmul=True, block_batch=8)
    x3 = jax.random.normal(k_obs3, (16, in_dim), jnp.float32)
    mu, base3 = ac_box(x3)
    jax.block_until_ready((mu, base3))
    r_mu, r_base3 = ac_box.reference(x3)
    assert mu.shape == (16, action_dim) and base3.shape == (16, 1)
    assert jnp.allclose(mu, r_mu, atol=1e-2, rtol=1e-2)
    assert jnp.allclose(base3, r_base3, atol=1e-2, rtol=1e-2)
    mu_out, std_out = ac_box.get_policy_outputs(x3)
    assert std_out.shape == (16, action_dim)

    print("KERNEL_OK")
</pallas_src>

<mosaic_0001>
module attributes {stable_mosaic.version = 11 : i64} {
  func.func @_mlp_actor_critic_kernel(%arg0: i32, %arg1: memref<8x41xf32, #tpu.memory_space<vmem>>, %arg2: memref<41x128xf32, #tpu.memory_space<vmem>>, %arg3: memref<1x128xf32, #tpu.memory_space<vmem>>, %arg4: memref<128x128xf32, #tpu.memory_space<vmem>>, %arg5: memref<1x128xf32, #tpu.memory_space<vmem>>, %arg6: memref<128x128xf32, #tpu.memory_space<vmem>>, %arg7: memref<1x128xf32, #tpu.memory_space<vmem>>, %arg8: memref<41x128xf32, #tpu.memory_space<vmem>>, %arg9: memref<1x128xf32, #tpu.memory_space<vmem>>, %arg10: memref<8x128xf32, #tpu.memory_space<vmem>>, %arg11: memref<8x128xf32, #tpu.memory_space<vmem>>) attributes {dimension_semantics = [#tpu.dimension_semantics<parallel>], iteration_bounds = array<i64: 3>, scalar_prefetch = 0 : i64, scratch_operands = 0 : i64, tpu.core_type = #tpu.core_type<tc>, window_params = [{transform_indices = @transform_0, window_bounds = array<i64: 8, 41>}, {pipeline_mode = #tpu.pipeline_mode<synchronous>, transform_indices = @transform_1, window_bounds = array<i64: 41, 128>}, {pipeline_mode = #tpu.pipeline_mode<synchronous>, transform_indices = @transform_2, window_bounds = array<i64: 1, 128>}, {pipeline_mode = #tpu.pipeline_mode<synchronous>, transform_indices = @transform_3, window_bounds = array<i64: 128, 128>}, {pipeline_mode = #tpu.pipeline_mode<synchronous>, transform_indices = @transform_4, window_bounds = array<i64: 1, 128>}, {pipeline_mode = #tpu.pipeline_mode<synchronous>, transform_indices = @transform_5, window_bounds = array<i64: 128, 128>}, {pipeline_mode = #tpu.pipeline_mode<synchronous>, transform_indices = @transform_6, window_bounds = array<i64: 1, 128>}, {pipeline_mode = #tpu.pipeline_mode<synchronous>, transform_indices = @transform_7, window_bounds = array<i64: 41, 128>}, {pipeline_mode = #tpu.pipeline_mode<synchronous>, transform_indices = @transform_8, window_bounds = array<i64: 1, 128>}, {transform_indices = @transform_9, window_bounds = array<i64: 8, 128>}, {transform_indices = @transform_10, window_bounds = array<i64: 8, 128>}]} {
    %c0 = arith.constant 0 : index
    %c0_0 = arith.constant 0 : index
    %0 = vector.load %arg1[%c0, %c0_0] : memref<8x41xf32, #tpu.memory_space<vmem>>, vector<8x41xf32>
    %c0_1 = arith.constant 0 : index
    %c0_2 = arith.constant 0 : index
    %1 = vector.load %arg2[%c0_1, %c0_2] : memref<41x128xf32, #tpu.memory_space<vmem>>, vector<41x128xf32>
    %cst = arith.constant dense<0.000000e+00> : vector<8x128xf32>
    %2 = tpu.matmul %0, %1, %cst {dimension_numbers = #tpu.dot_dimension_numbers<[1], [0], [0], [1], [0, 0, 1, 1], [], []>} : vector<8x41xf32>, vector<41x128xf32>, vector<8x128xf32> -> vector<8x128xf32>
    %c0_3 = arith.constant 0 : index
    %c0_4 = arith.constant 0 : index
    %3 = vector.load %arg3[%c0_3, %c0_4] : memref<1x128xf32, #tpu.memory_space<vmem>>, vector<1x128xf32>
    %4 = vector.broadcast %3 : vector<1x128xf32> to vector<8x128xf32>
    %5 = arith.addf %2, %4 : vector<8x128xf32>
    %6 = math.tanh %5 : vector<8x128xf32>
    %c0_5 = arith.constant 0 : index
    %c0_6 = arith.constant 0 : index
    %7 = vector.load %arg4[%c0_5, %c0_6] : memref<128x128xf32, #tpu.memory_space<vmem>>, vector<128x128xf32>
    %cst_7 = arith.constant dense<0.000000e+00> : vector<8x128xf32>
    %8 = tpu.matmul %6, %7, %cst_7 {dimension_numbers = #tpu.dot_dimension_numbers<[1], [0], [0], [1], [0, 0, 1, 1], [], []>} : vector<8x128xf32>, vector<128x128xf32>, vector<8x128xf32> -> vector<8x128xf32>
    %c0_8 = arith.constant 0 : index
    %c0_9 = arith.constant 0 : index
    %9 = vector.load %arg5[%c0_8, %c0_9] : memref<1x128xf32, #tpu.memory_space<vmem>>, vector<1x128xf32>
    %10 = vector.broadcast %9 : vector<1x128xf32> to vector<8x128xf32>
    %11 = arith.addf %8, %10 : vector<8x128xf32>
    %12 = math.tanh %11 : vector<8x128xf32>
    %c0_10 = arith.constant 0 : index
    %c0_11 = arith.constant 0 : index
    %13 = vector.load %arg6[%c0_10, %c0_11] : memref<128x128xf32, #tpu.memory_space<vmem>>, vector<128x128xf32>
    %cst_12 = arith.constant dense<0.000000e+00> : vector<8x128xf32>
    %14 = tpu.matmul %12, %13, %cst_12 {dimension_numbers = #tpu.dot_dimension_numbers<[1], [0], [0], [1], [0, 0, 1, 1], [], []>} : vector<8x128xf32>, vector<128x128xf32>, vector<8x128xf32> -> vector<8x128xf32>
    %c0_13 = arith.constant 0 : index
    %c0_14 = arith.constant 0 : index
    %15 = vector.load %arg7[%c0_13, %c0_14] : memref<1x128xf32, #tpu.memory_space<vmem>>, vector<1x128xf32>
    %16 = vector.broadcast %15 : vector<1x128xf32> to vector<8x128xf32>
    %17 = arith.addf %14, %16 : vector<8x128xf32>
    %c0_15 = arith.constant 0 : index
    %c0_16 = arith.constant 0 : index
    %18 = vector.load %arg8[%c0_15, %c0_16] : memref<41x128xf32, #tpu.memory_space<vmem>>, vector<41x128xf32>
    %cst_17 = arith.constant dense<0.000000e+00> : vector<8x128xf32>
    %19 = tpu.matmul %0, %18, %cst_17 {dimension_numbers = #tpu.dot_dimension_numbers<[1], [0], [0], [1], [0, 0, 1, 1], [], []>} : vector<8x41xf32>, vector<41x128xf32>, vector<8x128xf32> -> vector<8x128xf32>
    %c0_18 = arith.constant 0 : index
    %c0_19 = arith.constant 0 : index
    %20 = vector.load %arg9[%c0_18, %c0_19] : memref<1x128xf32, #tpu.memory_space<vmem>>, vector<1x128xf32>
    %21 = vector.broadcast %20 : vector<1x128xf32> to vector<8x128xf32>
    %22 = arith.addf %19, %21 : vector<8x128xf32>
    %c0_20 = arith.constant 0 : index
    %c0_21 = arith.constant 0 : index
    %23 = vector.load %arg10[%c0_20, %c0_21] : memref<8x128xf32, #tpu.memory_space<vmem>>, vector<8x128xf32>
    tpu.vector_store %arg10[%c0_20, %c0_21], %17 {strides = array<i32>} : memref<8x128xf32, #tpu.memory_space<vmem>>, vector<8x128xf32>,
    %c0_22 = arith.constant 0 : index
    %c0_23 = arith.constant 0 : index
    %24 = vector.load %arg11[%c0_22, %c0_23] : memref<8x128xf32, #tpu.memory_space<vmem>>, vector<8x128xf32>
    tpu.vector_store %arg11[%c0_22, %c0_23], %22 {strides = array<i32>} : memref<8x128xf32, #tpu.memory_space<vmem>>, vector<8x128xf32>,
    return
  }
  func.func @transform_0(%arg0: i32) -> (i32, i32) {
    %c0_i32 = arith.constant 0 : i32
    %c0_i32_0 = arith.constant 0 : i32
    return %arg0, %c0_i32 : i32, i32
  }
  func.func @transform_1(%arg0: i32) -> (i32, i32) {
    %c0_i32 = arith.constant 0 : i32
    %c0_i32_0 = arith.constant 0 : i32
    %c0_i32_1 = arith.constant 0 : i32
    return %c0_i32, %c0_i32_0 : i32, i32
  }
  func.func @transform_2(%arg0: i32) -> (i32, i32) {
    %c0_i32 = arith.constant 0 : i32
    %c0_i32_0 = arith.constant 0 : i32
    %c0_i32_1 = arith.constant 0 : i32
    return %c0_i32, %c0_i32_0 : i32, i32
  }
  func.func @transform_3(%arg0: i32) -> (i32, i32) {
    %c0_i32 = arith.constant 0 : i32
    %c0_i32_0 = arith.constant 0 : i32
    %c0_i32_1 = arith.constant 0 : i32
    return %c0_i32, %c0_i32_0 : i32, i32
  }
  func.func @transform_4(%arg0: i32) -> (i32, i32) {
    %c0_i32 = arith.constant 0 : i32
    %c0_i32_0 = arith.constant 0 : i32
    %c0_i32_1 = arith.constant 0 : i32
    return %c0_i32, %c0_i32_0 : i32, i32
  }
  func.func @transform_5(%arg0: i32) -> (i32, i32) {
    %c0_i32 = arith.constant 0 : i32
    %c0_i32_0 = arith.constant 0 : i32
    %c0_i32_1 = arith.constant 0 : i32
    return %c0_i32, %c0_i32_0 : i32, i32
  }
  func.func @transform_6(%arg0: i32) -> (i32, i32) {
    %c0_i32 = arith.constant 0 : i32
    %c0_i32_0 = arith.constant 0 : i32
    %c0_i32_1 = arith.constant 0 : i32
    return %c0_i32, %c0_i32_0 : i32, i32
  }
  func.func @transform_7(%arg0: i32) -> (i32, i32) {
    %c0_i32 = arith.constant 0 : i32
    %c0_i32_0 = arith.constant 0 : i32
    %c0_i32_1 = arith.constant 0 : i32
    return %c0_i32, %c0_i32_0 : i32, i32
  }
  func.func @transform_8(%arg0: i32) -> (i32, i32) {
    %c0_i32 = arith.constant 0 : i32
    %c0_i32_0 = arith.constant 0 : i32
    %c0_i32_1 = arith.constant 0 : i32
    return %c0_i32, %c0_i32_0 : i32, i32
  }
  func.func @transform_9(%arg0: i32) -> (i32, i32) {
    %c0_i32 = arith.constant 0 : i32
    %c0_i32_0 = arith.constant 0 : i32
    return %arg0, %c0_i32 : i32, i32
  }
  func.func @transform_10(%arg0: i32) -> (i32, i32) {
    %c0_i32 = arith.constant 0 : i32
    %c0_i32_0 = arith.constant 0 : i32
    return %arg0, %c0_i32 : i32, i32
  }
}

</mosaic_0001>

<llo_original>
// kernel: tpu_custom_call.1
$region0: #{tpu_custom_call.1}
  #allocation0 [shape = 'u32[]', space=smem, size = 0x4, offset = 0x4, fixed_abs, tag = 'smem constant byte address 0x4 - core index']
  #allocation1 [shape = 'u32[144,128]{1,0:T(1,128)}', space=vmem, size = 0x12000, scoped, tag = 'internal scratch']
  %s0 = inlined_call_operand.hbm [shape: f32[24,41], index: 0, kind: input, shape index: {}]
  %s1 = inlined_call_operand.hbm [shape: f32[41,128], index: 1, kind: input, shape index: {}]
  %s2 = inlined_call_operand.vmem [shape: f32[1,128], index: 2, kind: input, shape index: {}]
  %s3 = inlined_call_operand.hbm [shape: f32[128,128], index: 3, kind: input, shape index: {}]
  %s4 = inlined_call_operand.vmem [shape: f32[1,128], index: 4, kind: input, shape index: {}]
  %s5 = inlined_call_operand.hbm [shape: f32[128,128], index: 5, kind: input, shape index: {}]
  %s6 = inlined_call_operand.vmem [shape: f32[1,128], index: 6, kind: input, shape index: {}]
  %s7 = inlined_call_operand.hbm [shape: f32[41,128], index: 7, kind: input, shape index: {}]
  %s8 = inlined_call_operand.vmem [shape: f32[1,128], index: 8, kind: input, shape index: {}]
  %s9 = inlined_call_operand.hbm [shape: f32[24,128], index: 9, kind: output, shape index: {0}]
  %s10 = inlined_call_operand.hbm [shape: f32[24,128], index: 10, kind: output, shape index: {1}]
  %11 = xla_tuple %s9, %s10
  %s12 = sld [smem:[#allocation0]]
  $region97: #{tpu_custom_call.1} parent=0
    _
  %s14 = ssub.s32 1, %s12
  %s15 = scalar_select 0, %s14, %s12
  $region1: #{tpu_custom_call.1} parent=0
    #allocation2 [shape = 'u8[8192]{0}', space=vmem, size = 0x2000, scoped, tag = 'input window, operand 0']
    #allocation3 [shape = 's32[2]{0}', space=sflag, size = 0x8, scoped, tag = 'scoped memory for tpu_custom_call.1']
    #allocation4 [shape = 's32[2]{0}', space=sflag, size = 0x8, scoped, tag = 'scoped memory for tpu_custom_call.1']
    #allocation5 [shape = 'u8[24576]{0}', space=vmem, size = 0x6000, scoped, tag = 'input window, operand 1, single buffered']
    #allocation6 [shape = 's32[1]{0}', space=sflag, size = 0x4, scoped, tag = 'scoped memory for tpu_custom_call.1']
    #allocation7 [shape = 'u8[65536]{0}', space=vmem, size = 0x10000, scoped, tag = 'input window, operand 3, single buffered']
    #allocation8 [shape = 'u8[65536]{0}', space=vmem, size = 0x10000, scoped, tag = 'input window, operand 5, single buffered']
    #allocation9 [shape = 's32[1]{0}', space=sflag, size = 0x4, scoped, tag = 'scoped memory for tpu_custom_call.1']
    #allocation10 [shape = 'u8[24576]{0}', space=vmem, size = 0x6000, scoped, tag = 'input window, operand 7, single buffered']
    #allocation11 [shape = 'u8[8192]{0}', space=vmem, size = 0x2000, scoped, tag = 'output window, operand 0']
    #allocation12 [shape = 'u8[8192]{0}', space=vmem, size = 0x2000, scoped, tag = 'output window, operand 1']
    #allocation13 [shape = 's32[2]{0}', space=sflag, size = 0x8, scoped, tag = 'scoped memory for tpu_custom_call.1']
    %16 = vsyncpa [#allocation3], 0
    %s17 = scalar_lea.sflag [#allocation3], 1
    %18 = vsyncpa %s17, 0
    %19 = vsyncpa [#allocation6], 0
    %20 = vsyncpa [#allocation9], 0
    %21 = vsyncpa [#allocation4], 0
    %s22 = scalar_lea.sflag [#allocation4], 1
    %23 = vsyncpa %s22, 0
    %24 = vsyncpa [#allocation13], 0
    %s25 = scalar_lea.sflag [#allocation13], 1
    %26 = vsyncpa %s25, 0
    loop: start=0, step=1, limit=5
    $region2: #{tpu_custom_call.1} parent=1 // loop_pre_header
      _
    $region3: #{tpu_custom_call.1} parent=1 // loop_header
      %s28 = sphi 0, %s32
      %p29 = scmp.ge.s32.totalorder %s28, 5
      %s38 = sphi 0, %s40
      %s41 = sphi 0, %s38
      %s42 = sphi 0, %s41
      %s58 = sphi 0, %s42
      %s62 = sphi 0, %s62
      %s64 = sphi 0, %s62
      %s65 = sphi 0, %s64
      %s79 = sphi 0, %s65
      %s83 = sphi 0, %s83
      %s85 = sphi 0, %s83
      %s86 = sphi 0, %s85
      %s100 = sphi 0, %s86
      %s104 = sphi 0, %s104
      %s106 = sphi 0, %s104
      %s107 = sphi 0, %s106
      %s121 = sphi 0, %s107
      %s125 = sphi 0, %s125
      %s127 = sphi 0, %s125
      %s128 = sphi 0, %s127
      %s142 = sphi 0, %s128
      %s146 = sphi 0, %s146
      %s148 = sphi 0, %s146
      %s149 = sphi 0, %s148
      %s163 = sphi 0, %s149
      %s167 = sphi 0, %s167
      %s169 = sphi 0, %s167
      %s170 = sphi 0, %s169
      %s184 = sphi 0, %s170
      %s188 = sphi 0, %s188
      %s190 = sphi 0, %s188
      %s191 = sphi 0, %s190
      %s205 = sphi 0, %s191
      %s209 = sphi 0, %s209
      %s211 = sphi 0, %s209
      %s212 = sphi 0, %s211
      %s226 = sphi 0, %s212
      %s232 = sphi 0, %s234
      %s235 = sphi 0, %s232
      %s236 = sphi 0, %s235
      %s252 = sphi 0, %s236
      %s258 = sphi 0, %s260
      %s261 = sphi 0, %s258
      %s262 = sphi 0, %s261
      %s278 = sphi 0, %s262
    $region4: #{tpu_custom_call.1} parent=1 // loop_header_branch
      %31 = sbr.rel (%p29) target = $region8
    $region5: #{tpu_custom_call.1} parent=1 // loop_body
      %s33 = ssub.s32 %s28, 1
      %s34 = ssub.s32 %s28, 2
      %s35 = sadd.s32 %s28, 1
      %s36 = ssub.s32 %s28, %s35
      %p37 = scmp.eq.s32.totalorder %s36, 0
      %s39 = sadd.s32 %s38, 1
      %s40 = scalar_select %p37, %s38, %s39
      %p43 = pneg %p37
      %p44 = scmp.eq.s32.totalorder %s28, 2
      %p45 = por %p43, %p44
      %p46 = scmp.ne.s32.totalorder %s38, %s41
      %p47 = scmp.eq.s32.totalorder %s28, 0
      %p48 = por %p46, %p47
      %p49 = scmp.ne.s32.totalorder %s38, %s41
      %p50 = scmp.eq.s32.totalorder %s33, 2
      %p51 = por %p49, %p50
      %p52 = scmp.ne.s32.totalorder %s41, %s42
      %p53 = scmp.eq.s32.totalorder %s33, 0
      %p54 = por %p52, %p53
      %p55 = scmp.ne.s32.totalorder %s41, %s42
      %p56 = scmp.eq.s32.totalorder %s34, 2
      %p57 = por %p55, %p56
      %p59 = scmp.ne.s32.totalorder %s42, %s58
      %p60 = scmp.eq.s32.totalorder %s34, 0
      %p61 = por %p59, %p60
      %s63 = sadd.s32 %s62, 1
      %p66 = scmp.eq.s32.totalorder %s28, 2
      %p67 = scmp.ne.s32.totalorder %s62, %s64
      %p68 = scmp.eq.s32.totalorder %s28, 0
      %p69 = por %p67, %p68
      %p70 = scmp.ne.s32.totalorder %s62, %s64
      %p71 = scmp.eq.s32.totalorder %s33, 2
      %p72 = por %p70, %p71
      %p73 = scmp.ne.s32.totalorder %s64, %s65
      %p74 = scmp.eq.s32.totalorder %s33, 0
      %p75 = por %p73, %p74
      %p76 = scmp.ne.s32.totalorder %s64, %s65
      %p77 = scmp.eq.s32.totalorder %s34, 2
      %p78 = por %p76, %p77
      %p80 = scmp.ne.s32.totalorder %s65, %s79
      %p81 = scmp.eq.s32.totalorder %s34, 0
      %p82 = por %p80, %p81
      %s84 = sadd.s32 %s83, 1
      %p87 = scmp.eq.s32.totalorder %s28, 2
      %p88 = scmp.ne.s32.totalorder %s83, %s85
      %p89 = scmp.eq.s32.totalorder %s28, 0
      %p90 = por %p88, %p89
      %p91 = scmp.ne.s32.totalorder %s83, %s85
      %p92 = scmp.eq.s32.totalorder %s33, 2
      %p93 = por %p91, %p92
      %p94 = scmp.ne.s32.totalorder %s85, %s86
      %p95 = scmp.eq.s32.totalorder %s33, 0
      %p96 = por %p94, %p95
      %p97 = scmp.ne.s32.totalorder %s85, %s86
      %p98 = scmp.eq.s32.totalorder %s34, 2
      %p99 = por %p97, %p98
      %p101 = scmp.ne.s32.totalorder %s86, %s100
      %p102 = scmp.eq.s32.totalorder %s34, 0
      %p103 = por %p101, %p102
      %s105 = sadd.s32 %s104, 1
      %p108 = scmp.eq.s32.totalorder %s28, 2
      %p109 = scmp.ne.s32.totalorder %s104, %s106
      %p110 = scmp.eq.s32.totalorder %s28, 0
      %p111 = por %p109, %p110
      %p112 = scmp.ne.s32.totalorder %s104, %s106
      %p113 = scmp.eq.s32.totalorder %s33, 2
      %p114 = por %p112, %p113
      %p115 = scmp.ne.s32.totalorder %s106, %s107
      %p116 = scmp.eq.s32.totalorder %s33, 0
      %p117 = por %p115, %p116
      %p118 = scmp.ne.s32.totalorder %s106, %s107
      %p119 = scmp.eq.s32.totalorder %s34, 2
      %p120 = por %p118, %p119
      %p122 = scmp.ne.s32.totalorder %s107, %s121
      %p123 = scmp.eq.s32.totalorder %s34, 0
      %p124 = por %p122, %p123
      %s126 = sadd.s32 %s125, 1
      %p129 = scmp.eq.s32.totalorder %s28, 2
      %p130 = scmp.ne.s32.totalorder %s125, %s127
      %p131 = scmp.eq.s32.totalorder %s28, 0
      %p132 = por %p130, %p131
      %p133 = scmp.ne.s32.totalorder %s125, %s127
      %p134 = scmp.eq.s32.totalorder %s33, 2
      %p135 = por %p133, %p134
      %p136 = scmp.ne.s32.totalorder %s127, %s128
      %p137 = scmp.eq.s32.totalorder %s33, 0
      %p138 = por %p136, %p137
      %p139 = scmp.ne.s32.totalorder %s127, %s128
      %p140 = scmp.eq.s32.totalorder %s34, 2
      %p141 = por %p139, %p140
      %p143 = scmp.ne.s32.totalorder %s128, %s142
      %p144 = scmp.eq.s32.totalorder %s34, 0
      %p145 = por %p143, %p144
      %s147 = sadd.s32 %s146, 1
      %p150 = scmp.eq.s32.totalorder %s28, 2
      %p151 = scmp.ne.s32.totalorder %s146, %s148
      %p152 = scmp.eq.s32.totalorder %s28, 0
      %p153 = por %p151, %p152
      %p154 = scmp.ne.s32.totalorder %s146, %s148
      %p155 = scmp.eq.s32.totalorder %s33, 2
      %p156 = por %p154, %p155
      %p157 = scmp.ne.s32.totalorder %s148, %s149
      %p158 = scmp.eq.s32.totalorder %s33, 0
      %p159 = por %p157, %p158
      %p160 = scmp.ne.s32.totalorder %s148, %s149
      %p161 = scmp.eq.s32.totalorder %s34, 2
      %p162 = por %p160, %p161
      %p164 = scmp.ne.s32.totalorder %s149, %s163
      %p165 = scmp.eq.s32.totalorder %s34, 0
      %p166 = por %p164, %p165
      %s168 = sadd.s32 %s167, 1
      %p171 = scmp.eq.s32.totalorder %s28, 2
      %p172 = scmp.ne.s32.totalorder %s167, %s169
      %p173 = scmp.eq.s32.totalorder %s28, 0
      %p174 = por %p172, %p173
      %p175 = scmp.ne.s32.totalorder %s167, %s169
      %p176 = scmp.eq.s32.totalorder %s33, 2
      %p177 = por %p175, %p176
      %p178 = scmp.ne.s32.totalorder %s169, %s170
      %p179 = scmp.eq.s32.totalorder %s33, 0
      %p180 = por %p178, %p179
      %p181 = scmp.ne.s32.totalorder %s169, %s170
      %p182 = scmp.eq.s32.totalorder %s34, 2
      %p183 = por %p181, %p182
      %p185 = scmp.ne.s32.totalorder %s170, %s184
      %p186 = scmp.eq.s32.totalorder %s34, 0
      %p187 = por %p185, %p186
      %s189 = sadd.s32 %s188, 1
      %p192 = scmp.eq.s32.totalorder %s28, 2
      %p193 = scmp.ne.s32.totalorder %s188, %s190
      %p194 = scmp.eq.s32.totalorder %s28, 0
      %p195 = por %p193, %p194
      %p196 = scmp.ne.s32.totalorder %s188, %s190
      %p197 = scmp.eq.s32.totalorder %s33, 2
      %p198 = por %p196, %p197
      %p199 = scmp.ne.s32.totalorder %s190, %s191
      %p200 = scmp.eq.s32.totalorder %s33, 0
      %p201 = por %p199, %p200
      %p202 = scmp.ne.s32.totalorder %s190, %s191
      %p203 = scmp.eq.s32.totalorder %s34, 2
      %p204 = por %p202, %p203
      %p206 = scmp.ne.s32.totalorder %s191, %s205
      %p207 = scmp.eq.s32.totalorder %s34, 0
      %p208 = por %p206, %p207
      %s210 = sadd.s32 %s209, 1
      %p213 = scmp.eq.s32.totalorder %s28, 2
      %p214 = scmp.ne.s32.totalorder %s209, %s211
      %p215 = scmp.eq.s32.totalorder %s28, 0
      %p216 = por %p214, %p215
      %p217 = scmp.ne.s32.totalorder %s209, %s211
      %p218 = scmp.eq.s32.totalorder %s33, 2
      %p219 = por %p217, %p218
      %p220 = scmp.ne.s32.totalorder %s211, %s212
      %p221 = scmp.eq.s32.totalorder %s33, 0
      %p222 = por %p220, %p221
      %p223 = scmp.ne.s32.totalorder %s211, %s212
      %p224 = scmp.eq.s32.totalorder %s34, 2
      %p225 = por %p223, %p224
      %p227 = scmp.ne.s32.totalorder %s212, %s226
      %p228 = scmp.eq.s32.totalorder %s34, 0
      %p229 = por %p227, %p228
      %s230 = ssub.s32 %s28, %s35
      %p231 = scmp.eq.s32.totalorder %s230, 0
      %s233 = sadd.s32 %s232, 1
      %s234 = scalar_select %p231, %s232, %s233
      %p237 = pneg %p231
      %p238 = scmp.eq.s32.totalorder %s28, 2
      %p239 = por %p237, %p238
      %p240 = scmp.ne.s32.totalorder %s232, %s235
      %p241 = scmp.eq.s32.totalorder %s28, 0
      %p242 = por %p240, %p241
      %p243 = scmp.ne.s32.totalorder %s232, %s235
      %p244 = scmp.eq.s32.totalorder %s33, 2
      %p245 = por %p243, %p244
      %p246 = scmp.ne.s32.totalorder %s235, %s236
      %p247 = scmp.eq.s32.totalorder %s33, 0
      %p248 = por %p246, %p247
      %p249 = scmp.ne.s32.totalorder %s235, %s236
      %p250 = scmp.eq.s32.totalorder %s34, 2
      %p251 = por %p249, %p250
      %p253 = scmp.ne.s32.totalorder %s236, %s252
      %p254 = scmp.eq.s32.totalorder %s34, 0
      %p255 = por %p253, %p254
      %s256 = ssub.s32 %s28, %s35
      %p257 = scmp.eq.s32.totalorder %s256, 0
      %s259 = sadd.s32 %s258, 1
      %s260 = scalar_select %p257, %s258, %s259
      %p263 = pneg %p257
      %p264 = scmp.eq.s32.totalorder %s28, 2
      %p265 = por %p263, %p264
      %p266 = scmp.ne.s32.totalorder %s258, %s261
      %p267 = scmp.eq.s32.totalorder %s28, 0
      %p268 = por %p266, %p267
      %p269 = scmp.ne.s32.totalorder %s258, %s261
      %p270 = scmp.eq.s32.totalorder %s33, 2
      %p271 = por %p269, %p270
      %p272 = scmp.ne.s32.totalorder %s261, %s262
      %p273 = scmp.eq.s32.totalorder %s33, 0
      %p274 = por %p272, %p273
      %p275 = scmp.ne.s32.totalorder %s261, %s262
      %p276 = scmp.eq.s32.totalorder %s34, 2
      %p277 = por %p275, %p276
      %p279 = scmp.ne.s32.totalorder %s262, %s278
      %p280 = scmp.eq.s32.totalorder %s34, 0
      %p281 = por %p279, %p280
      %p282 = scmp.le.s32.totalorder 1, %s28
      %p283 = scmp.lt.s32.totalorder %s28, 4
      %p284 = pnand %p282, %p283
      %p285 = pneg %p284
      // Predicated region
      $region9: #{tpu_custom_call.1} parent=5 // pred_check
        _
      $region10: #{tpu_custom_call.1} parent=5 // pred_check_branch
        %287 = sbr.rel (%p284) target = $region12
      $region11: #{tpu_custom_call.1} parent=5 // pred_region
        %s288 = ssub.s32 %s28, 1
        // Predicated region
        $region13: #{tpu_custom_call.1} parent=11 // pred_check
          %p289 = pneg %p75
        $region14: #{tpu_custom_call.1} parent=11 // pred_check_branch
          %291 = sbr.rel (%p289) target = $region16
        $region15: #{tpu_custom_call.1} parent=11 // pred_region
          %s293 = ssub.s32 768, 768
          %294 = vsyncadd [#allocation6], %s293
          %s295 = sshll.u32 [#allocation5], 4
          %s296 = int_to_ptr.vmem [resolvable:$true] %s295
          %301 = dma.hbm_to_vmem [thread:$0]  %s1, 768, %s296, [#allocation6], 128, 128, 8
        $region16: #{tpu_custom_call.1} parent=11 // pred_fallthru
          _
        // Predicated region
        $region17: #{tpu_custom_call.1} parent=11 // pred_check
          %p302 = pneg %p96
        $region18: #{tpu_custom_call.1} parent=11 // pred_check_branch
          %304 = sbr.rel (%p302) target = $region20
        $region19: #{tpu_custom_call.1} parent=11 // pred_region
          _
        $region20: #{tpu_custom_call.1} parent=11 // pred_fallthru
          _
        // Predicated region
        $region21: #{tpu_custom_call.1} parent=11 // pred_check
          %p305 = pneg %p117
        $region22: #{tpu_custom_call.1} parent=11 // pred_check_branch
          %307 = sbr.rel (%p305) target = $region24
        $region23: #{tpu_custom_call.1} parent=11 // pred_region
          %s309 = ssub.s32 2048, 2048
          %310 = vsyncadd [#allocation6], %s309
          %s311 = sshll.u32 [#allocation7], 4
          %s312 = int_to_ptr.vmem [resolvable:$true] %s311
          %317 = dma.hbm_to_vmem [thread:$0]  %s3, 2048, %s312, [#allocation6], 128, 128, 8
        $region24: #{tpu_custom_call.1} parent=11 // pred_fallthru
          _
        // Predicated region
        $region25: #{tpu_custom_call.1} parent=11 // pred_check
          %p318 = pneg %p138
        $region26: #{tpu_custom_call.1} parent=11 // pred_check_branch
          %320 = sbr.rel (%p318) target = $region28
        $region27: #{tpu_custom_call.1} parent=11 // pred_region
          _
        $region28: #{tpu_custom_call.1} parent=11 // pred_fallthru
          _
        // Predicated region
        $region29: #{tpu_custom_call.1} parent=11 // pred_check
          %p321 = pneg %p159
        $region30: #{tpu_custom_call.1} parent=11 // pred_check_branch
          %323 = sbr.rel (%p321) target = $region32
        $region31: #{tpu_custom_call.1} parent=11 // pred_region
          %s325 = ssub.s32 2048, 2048
          %326 = vsyncadd [#allocation9], %s325
          %s327 = sshll.u32 [#allocation8], 4
          %s328 = int_to_ptr.vmem [resolvable:$true] %s327
          %333 = dma.hbm_to_vmem [thread:$0]  %s5, 2048, %s328, [#allocation9], 128, 128, 8
        $region32: #{tpu_custom_call.1} parent=11 // pred_fallthru
          _
        // Predicated region
        $region33: #{tpu_custom_call.1} parent=11 // pred_check
          %p334 = pneg %p180
        $region34: #{tpu_custom_call.1} parent=11 // pred_check_branch
          %336 = sbr.rel (%p334) target = $region36
        $region35: #{tpu_custom_call.1} parent=11 // pred_region
          _
        $region36: #{tpu_custom_call.1} parent=11 // pred_fallthru
          _
        // Predicated region
        $region37: #{tpu_custom_call.1} parent=11 // pred_check
          %p337 = pneg %p201
        $region38: #{tpu_custom_call.1} parent=11 // pred_check_branch
          %339 = sbr.rel (%p337) target = $region40
        $region39: #{tpu_custom_call.1} parent=11 // pred_region
          %s341 = ssub.s32 768, 768
          %342 = vsyncadd [#allocation9], %s341
          %s343 = sshll.u32 [#allocation10], 4
          %s344 = int_to_ptr.vmem [resolvable:$true] %s343
          %349 = dma.hbm_to_vmem [thread:$0]  %s7, 768, %s344, [#allocation9], 128, 128, 8
        $region40: #{tpu_custom_call.1} parent=11 // pred_fallthru
          _
        // Predicated region
        $region41: #{tpu_custom_call.1} parent=11 // pred_check
          %p350 = pneg %p222
        $region42: #{tpu_custom_call.1} parent=11 // pred_check_branch
          %352 = sbr.rel (%p350) target = $region44
        $region43: #{tpu_custom_call.1} parent=11 // pred_region
          _
        $region44: #{tpu_custom_call.1} parent=11 // pred_fallthru
          _
      $region12: #{tpu_custom_call.1} parent=5 // pred_fallthru
        _
      %p353 = scmp.lt.s32.totalorder %s28, 3
      // Predicated region
      $region45: #{tpu_custom_call.1} parent=5 // pred_check
        %p354 = pneg %p353
      $region46: #{tpu_custom_call.1} parent=5 // pred_check_branch
        %356 = sbr.rel (%p354) target = $region48
      $region47: #{tpu_custom_call.1} parent=5 // pred_region
        // Predicated region
        $region49: #{tpu_custom_call.1} parent=47 // pred_check
          %p357 = pneg %p48
        $region50: #{tpu_custom_call.1} parent=47 // pred_check_branch
          %359 = sbr.rel (%p357) target = $region52
        $region51: #{tpu_custom_call.1} parent=47 // pred_region
          %s360 = sand.u32 %s38, 1
          %s361 = scalar_lea.sflag [#allocation3], %s360
          %s362 = sand.u32 %s38, 1
          %s363 = smul.addr %s362, 8
          %s364 = scalar_lea.vmem [#allocation2], %s363
          %s366 = ssub.s32 128, 128
          %367 = vsyncadd %s361, %s366
          %s368 = smul.addr %s28, 128
          %s369 = scalar_lea.hbm %s0, %s368
          %s371 = sshll.u32 %s364, 4
          %s372 = int_to_ptr.vmem [resolvable:$true] %s371
          %374 = dma.hbm_to_vmem [thread:$0]  %s369, 128, %s372, %s361
        $region52: #{tpu_custom_call.1} parent=47 // pred_fallthru
          _
      $region48: #{tpu_custom_call.1} parent=5 // pred_fallthru
        _
      %p375 = scmp.le.s32.totalorder 1, %s28
      %p376 = scmp.lt.s32.totalorder %s28, 4
      %p377 = pnand %p375, %p376
      %p378 = pneg %p377
      // Predicated region
      $region53: #{tpu_custom_call.1} parent=5 // pred_check
        _
      $region54: #{tpu_custom_call.1} parent=5 // pred_check_branch
        %380 = sbr.rel (%p377) target = $region56
      $region55: #{tpu_custom_call.1} parent=5 // pred_region
        %s381 = ssub.s32 %s28, 1
        %s382 = sand.u32 %s41, 1
        %s383 = scalar_lea.sflag [#allocation3], %s382
        %s384 = sand.u32 %s41, 1
        %s385 = smul.addr %s384, 8
        %s386 = scalar_lea.vmem [#allocation2], %s385
        // Predicated region
        $region57: #{tpu_custom_call.1} parent=55 // pred_check
          %p387 = pneg %p54
        $region58: #{tpu_custom_call.1} parent=55 // pred_check_branch
          %389 = sbr.rel (%p387) target = $region60
        $region59: #{tpu_custom_call.1} parent=55 // pred_region
          %390 = dma.done %s383, 128
        $region60: #{tpu_custom_call.1} parent=55 // pred_fallthru
          _
        // Predicated region
        $region61: #{tpu_custom_call.1} parent=55 // pred_check
          %p391 = pneg %p75
        $region62: #{tpu_custom_call.1} parent=55 // pred_check_branch
          %393 = sbr.rel (%p391) target = $region64
        $region63: #{tpu_custom_call.1} parent=55 // pred_region
          %394 = dma.done [#allocation6], 768
        $region64: #{tpu_custom_call.1} parent=55 // pred_fallthru
          _
        // Predicated region
        $region65: #{tpu_custom_call.1} parent=55 // pred_check
          %p395 = pneg %p117
        $region66: #{tpu_custom_call.1} parent=55 // pred_check_branch
          %397 = sbr.rel (%p395) target = $region68
        $region67: #{tpu_custom_call.1} parent=55 // pred_region
          %398 = dma.done [#allocation6], 2048
        $region68: #{tpu_custom_call.1} parent=55 // pred_fallthru
          _
        // Predicated region
        $region69: #{tpu_custom_call.1} parent=55 // pred_check
          %p399 = pneg %p159
        $region70: #{tpu_custom_call.1} parent=55 // pred_check_branch
          %401 = sbr.rel (%p399) target = $region72
        $region71: #{tpu_custom_call.1} parent=55 // pred_region
          %402 = dma.done [#allocation9], 2048
        $region72: #{tpu_custom_call.1} parent=55 // pred_fallthru
          _
        // Predicated region
        $region73: #{tpu_custom_call.1} parent=55 // pred_check
          %p403 = pneg %p201
        $region74: #{tpu_custom_call.1} parent=55 // pred_check_branch
          %405 = sbr.rel (%p403) target = $region76
        $region75: #{tpu_custom_call.1} parent=55 // pred_region
          %406 = dma.done [#allocation9], 768
        $region76: #{tpu_custom_call.1} parent=55 // pred_fallthru
          _
        %s407 = sand.u32 %s41, 1
        %s408 = scalar_lea.sflag [#allocation3], %s407
        %s409 = sand.u32 %s41, 1
        %s410 = smul.addr %s409, 8
        %s411 = scalar_lea.vmem [#allocation2], %s410
        %p412 = pneg %p54
        %p413 = pneg %p51
        %p414 = pneg %p75
        %p415 = pneg %p72
        %p416 = pneg %p96
        %p417 = pneg %p93
        %p418 = pneg %p117
        %p419 = pneg %p114
        %p420 = pneg %p138
        %p421 = pneg %p135
        %p422 = pneg %p159
        %p423 = pneg %p156
        %p424 = pneg %p180
        %p425 = pneg %p177
        %p426 = pneg %p201
        %p427 = pneg %p198
        %p428 = pneg %p222
        %p429 = pneg %p219
        %p430 = pneg %p248
        %p431 = pneg %p245
        %s432 = sand.u32 %s235, 1
        %s433 = scalar_lea.sflag [#allocation4], %s432
        %s434 = sand.u32 %s235, 1
        %s435 = smul.addr %s434, 8
        %s436 = scalar_lea.vmem [#allocation11], %s435
        %p437 = pneg %p274
        %p438 = pneg %p271
        %s439 = sand.u32 %s261, 1
        %s440 = scalar_lea.sflag [#allocation13], %s439
        %s441 = sand.u32 %s261, 1
        %s442 = smul.addr %s441, 8
        %s443 = scalar_lea.vmem [#allocation12], %s442
        %v444 = vld [vmem:[%s386] sm:$0xff]
        %v445 = vld [vmem:[#allocation5] sm:$0xff]
        %v446 = vld [vmem:[#allocation5 + $0x8] sm:$0xff]
        %v447 = vld [vmem:[#allocation5 + $0x10] sm:$0xff]
        %v448 = vld [vmem:[#allocation5 + $0x18] sm:$0xff]
        %v449 = vld [vmem:[#allocation5 + $0x20] sm:$0xff]
        %v450 = vld [vmem:[#allocation5 + $0x28] sm:$0x1]
        %v451 = vld [vmem:[%s2] sm:$0x1]
        %v453 = vlaneseq
        %v454 = vshrl.u32 %v453, 7
        %v455 = vsub.s32 0, %v454
        %v456 = vrot.slane %v451, %v455
        %vm458 = vcmask 334848
        %v460 = vsel %vm458, %v444, 0
        %vm462 = vcmask 1040384
        %v464 = vsel %vm462, %v450, 0
        %466 = vmatprep.subr.mxu0 0.0
        %467 = vmatpush1.msra.mxu0 %v445
        %468 = vmatprep.subr.mxu0 0.0
        %469 = vmatpush1.msra.mxu0 %v446
        %470 = vmatprep.subr.mxu0 0.0
        %471 = vmatpush1.msra.mxu0 %v447
        %472 = vmatprep.subr.mxu0 0.0
        %473 = vmatpush1.msra.mxu0 %v448
        %474 = vmatprep.subr.mxu0 0.0
        %475 = vmatpush1.msra.mxu0 %v449
        %476 = vmatprep.subr.mxu0 0.0
        %477 = vmatpush1.msra.mxu0 %v464
        %478 = vmatprep.subr.mxu0 0.0
        %479 = vmatpush1.msra.mxu0 0.0
        %480 = vmatprep.subr.mxu0 0.0
        %481 = vmatpush1.msra.mxu0 0.0
        %482 = vmatprep.subr.mxu0 0.0
        %483 = vmatpush1.msra.mxu0 0.0
        %484 = vmatprep.subr.mxu0 0.0
        %485 = vmatpush1.msra.mxu0 0.0
        %486 = vmatprep.subr.mxu0 0.0
        %487 = vmatpush1.msra.mxu0 0.0
        %488 = vmatprep.subr.mxu0 0.0
        %489 = vmatpush1.msra.mxu0 0.0
        %490 = vmatprep.subr.mxu0 0.0
        %491 = vmatpush1.msra.mxu0 0.0
        %492 = vmatprep.subr.mxu0 0.0
        %493 = vmatpush1.msra.mxu0 0.0
        %494 = vmatprep.subr.mxu0 0.0
        %495 = vmatpush1.msra.mxu0 0.0
        %496 = vmatprep.subr.mxu0 0.0
        %497 = vmatpush1.msra.mxu0 0.0
        %498 = vmatprep.subr.mxu0 0.0
        %499 = vmatpush1.msra.mxu0 0.0
        %500 = vmatprep.subr.mxu0 0.0
        %501 = vmatpush1.msra.mxu0 0.0
        %502 = vmatprep.subr.mxu0 0.0
        %503 = vmatpush1.msra.mxu0 0.0
        %504 = vmatprep.subr.mxu0 0.0
        %505 = vmatpush1.msra.mxu0 0.0
        %506 = vmatprep.subr.mxu0 0.0
        %507 = vmatpush1.msra.mxu0 0.0
        %508 = vmatprep.subr.mxu0 0.0
        %509 = vmatpush1.msra.mxu0 0.0
        %510 = vmatprep.subr.mxu0 0.0
        %511 = vmatpush1.msra.mxu0 0.0
        %512 = vmatprep.subr.mxu0 0.0
        %513 = vmatpush1.msra.mxu0 0.0
        %514 = vmatprep.subr.mxu0 0.0
        %515 = vmatpush1.msra.mxu0 0.0
        %516 = vmatprep.subr.mxu0 0.0
        %517 = vmatpush1.msra.mxu0 0.0
        %518 = vmatprep.subr.mxu0 0.0
        %519 = vmatpush1.msra.mxu0 0.0
        %520 = vmatprep.subr.mxu0 0.0
        %521 = vmatpush1.msra.mxu0 0.0
        %522 = vmatprep.subr.mxu0 0.0
        %523 = vmatpush1.msra.mxu0 0.0
        %524 = vmatprep.subr.mxu0 0.0
        %525 = vmatpush1.msra.mxu0 0.0
        %526 = vmatprep.subr.mxu0 0.0
        %527 = vmatpush1.msra.mxu0 0.0
        %528 = vmatprep.subr.mxu0 0.0
        %529 = vmatpush1.msra.mxu0 0.0
        %530 = vmatprep.mubr.f32.mxu0 0.0
        %531 = vmatmul.mubr.f32.gmra.mrb[0].mxu0 %v460
        %v532 = vpop.f32.mrb[0].mxu0
        %v533 = vadd.f32 %v456, %v532
        %v534 = vpop.f32.mrb[0].mxu0
        %535 = vdwg.mxu0
        %v536 = vtanh.pop %v533
        %v537 = vld [vmem:[#allocation7] sm:$0xff]
        %v538 = vld [vmem:[#allocation7 + $0x8] sm:$0xff]
        %v539 = vld [vmem:[#allocation7 + $0x10] sm:$0xff]
        %v540 = vld [vmem:[#allocation7 + $0x18] sm:$0xff]
        %v541 = vld [vmem:[#allocation7 + $0x20] sm:$0xff]
        %v542 = vld [vmem:[#allocation7 + $0x28] sm:$0xff]
        %v543 = vld [vmem:[#allocation7 + $0x30] sm:$0xff]
        %v544 = vld [vmem:[#allocation7 + $0x38] sm:$0xff]
        %v545 = vld [vmem:[#allocation7 + $0x40] sm:$0xff]
        %v546 = vld [vmem:[#allocation7 + $0x48] sm:$0xff]
        %v547 = vld [vmem:[#allocation7 + $0x50] sm:$0xff]
        %v548 = vld [vmem:[#allocation7 + $0x58] sm:$0xff]
        %v549 = vld [vmem:[#allocation7 + $0x60] sm:$0xff]
        %v550 = vld [vmem:[#allocation7 + $0x68] sm:$0xff]
        %v551 = vld [vmem:[#allocation7 + $0x70] sm:$0xff]
        %v552 = vld [vmem:[#allocation7 + $0x78] sm:$0xff]
        %v553 = vld [vmem:[%s4] sm:$0x1]
        %v555 = vlaneseq
        %v556 = vshrl.u32 %v555, 7
        %v557 = vsub.s32 0, %v556
        %v558 = vrot.slane %v553, %v557
        %560 = vmatprep.subr.mxu0 0.0
        %561 = vmatpush1.msra.mxu0 %v537
        %562 = vmatprep.subr.mxu0 0.0
        %563 = vmatpush1.msra.mxu0 %v538
        %564 = vmatprep.subr.mxu0 0.0
        %565 = vmatpush1.msra.mxu0 %v539
        %566 = vmatprep.subr.mxu0 0.0
        %567 = vmatpush1.msra.mxu0 %v540
        %568 = vmatprep.subr.mxu0 0.0
        %569 = vmatpush1.msra.mxu0 %v541
        %570 = vmatprep.subr.mxu0 0.0
        %571 = vmatpush1.msra.mxu0 %v542
        %572 = vmatprep.subr.mxu0 0.0
        %573 = vmatpush1.msra.mxu0 %v543
        %574 = vmatprep.subr.mxu0 0.0
        %575 = vmatpush1.msra.mxu0 %v544
        %576 = vmatprep.subr.mxu0 0.0
        %577 = vmatpush1.msra.mxu0 %v545
        %578 = vmatprep.subr.mxu0 0.0
        %579 = vmatpush1.msra.mxu0 %v546
        %580 = vmatprep.subr.mxu0 0.0
        %581 = vmatpush1.msra.mxu0 %v547
        %582 = vmatprep.subr.mxu0 0.0
        %583 = vmatpush1.msra.mxu0 %v548
        %584 = vmatprep.subr.mxu0 0.0
        %585 = vmatpush1.msra.mxu0 %v549
        %586 = vmatprep.subr.mxu0 0.0
        %587 = vmatpush1.msra.mxu0 %v550
        %588 = vmatprep.subr.mxu0 0.0
        %589 = vmatpush1.msra.mxu0 %v551
        %590 = vmatprep.subr.mxu0 0.0
        %591 = vmatpush1.msra.mxu0 %v552
        %592 = vmatprep.subr.mxu0 0.0
        %593 = vmatpush1.msra.mxu0 0.0
        %594 = vmatprep.subr.mxu0 0.0
        %595 = vmatpush1.msra.mxu0 0.0
        %596 = vmatprep.subr.mxu0 0.0
        %597 = vmatpush1.msra.mxu0 0.0
        %598 = vmatprep.subr.mxu0 0.0
        %599 = vmatpush1.msra.mxu0 0.0
        %600 = vmatprep.subr.mxu0 0.0
        %601 = vmatpush1.msra.mxu0 0.0
        %602 = vmatprep.subr.mxu0 0.0
        %603 = vmatpush1.msra.mxu0 0.0
        %604 = vmatprep.subr.mxu0 0.0
        %605 = vmatpush1.msra.mxu0 0.0
        %606 = vmatprep.subr.mxu0 0.0
        %607 = vmatpush1.msra.mxu0 0.0
        %608 = vmatprep.subr.mxu0 0.0
        %609 = vmatpush1.msra.mxu0 0.0
        %610 = vmatprep.subr.mxu0 0.0
        %611 = vmatpush1.msra.mxu0 0.0
        %612 = vmatprep.subr.mxu0 0.0
        %613 = vmatpush1.msra.mxu0 0.0
        %614 = vmatprep.subr.mxu0 0.0
        %615 = vmatpush1.msra.mxu0 0.0
        %616 = vmatprep.subr.mxu0 0.0
        %617 = vmatpush1.msra.mxu0 0.0
        %618 = vmatprep.subr.mxu0 0.0
        %619 = vmatpush1.msra.mxu0 0.0
        %620 = vmatprep.subr.mxu0 0.0
        %621 = vmatpush1.msra.mxu0 0.0
        %622 = vmatprep.subr.mxu0 0.0
        %623 = vmatpush1.msra.mxu0 0.0
        %624 = vmatprep.mubr.f32.mxu0 0.0
        %625 = vmatmul.mubr.f32.gmra.mrb[0].mxu0 %v536
        %v626 = vpop.f32.mrb[0].mxu0
        %v627 = vadd.f32 %v558, %v626
        %v628 = vpop.f32.mrb[0].mxu0
        %629 = vdwg.mxu0
        %v630 = vtanh.pop %v627
        %v631 = vld [vmem:[#allocation8] sm:$0xff]
        %v632 = vld [vmem:[#allocation8 + $0x8] sm:$0xff]
        %v633 = vld [vmem:[#allocation8 + $0x10] sm:$0xff]
        %v634 = vld [vmem:[#allocation8 + $0x18] sm:$0xff]
        %v635 = vld [vmem:[#allocation8 + $0x20] sm:$0xff]
        %v636 = vld [vmem:[#allocation8 + $0x28] sm:$0xff]
        %v637 = vld [vmem:[#allocation8 + $0x30] sm:$0xff]
        %v638 = vld [vmem:[#allocation8 + $0x38] sm:$0xff]
        %v639 = vld [vmem:[#allocation8 + $0x40] sm:$0xff]
        %v640 = vld [vmem:[#allocation8 + $0x48] sm:$0xff]
        %v641 = vld [vmem:[#allocation8 + $0x50] sm:$0xff]
        %v642 = vld [vmem:[#allocation8 + $0x58] sm:$0xff]
        %v643 = vld [vmem:[#allocation8 + $0x60] sm:$0xff]
        %v644 = vld [vmem:[#allocation8 + $0x68] sm:$0xff]
        %v645 = vld [vmem:[#allocation8 + $0x70] sm:$0xff]
        %v646 = vld [vmem:[#allocation8 + $0x78] sm:$0xff]
        %v647 = vld [vmem:[%s6] sm:$0x1]
        %v649 = vlaneseq
        %v650 = vshrl.u32 %v649, 7
        %v651 = vsub.s32 0, %v650
        %v652 = vrot.slane %v647, %v651
        %654 = vmatprep.subr.mxu0 0.0
        %655 = vmatpush1.msra.mxu0 %v631
        %656 = vmatprep.subr.mxu0 0.0
        %657 = vmatpush1.msra.mxu0 %v632
        %658 = vmatprep.subr.mxu0 0.0
        %659 = vmatpush1.msra.mxu0 %v633
        %660 = vmatprep.subr.mxu0 0.0
        %661 = vmatpush1.msra.mxu0 %v634
        %662 = vmatprep.subr.mxu0 0.0
        %663 = vmatpush1.msra.mxu0 %v635
        %664 = vmatprep.subr.mxu0 0.0
        %665 = vmatpush1.msra.mxu0 %v636
        %666 = vmatprep.subr.mxu0 0.0
        %667 = vmatpush1.msra.mxu0 %v637
        %668 = vmatprep.subr.mxu0 0.0
        %669 = vmatpush1.msra.mxu0 %v638
        %670 = vmatprep.subr.mxu0 0.0
        %671 = vmatpush1.msra.mxu0 %v639
        %672 = vmatprep.subr.mxu0 0.0
        %673 = vmatpush1.msra.mxu0 %v640
        %674 = vmatprep.subr.mxu0 0.0
        %675 = vmatpush1.msra.mxu0 %v641
        %676 = vmatprep.subr.mxu0 0.0
        %677 = vmatpush1.msra.mxu0 %v642
        %678 = vmatprep.subr.mxu0 0.0
        %679 = vmatpush1.msra.mxu0 %v643
        %680 = vmatprep.subr.mxu0 0.0
        %681 = vmatpush1.msra.mxu0 %v644
        %682 = vmatprep.subr.mxu0 0.0
        %683 = vmatpush1.msra.mxu0 %v645
        %684 = vmatprep.subr.mxu0 0.0
        %685 = vmatpush1.msra.mxu0 %v646
        %686 = vmatprep.subr.mxu0 0.0
        %687 = vmatpush1.msra.mxu0 0.0
        %688 = vmatprep.subr.mxu0 0.0
        %689 = vmatpush1.msra.mxu0 0.0
        %690 = vmatprep.subr.mxu0 0.0
        %691 = vmatpush1.msra.mxu0 0.0
        %692 = vmatprep.subr.mxu0 0.0
        %693 = vmatpush1.msra.mxu0 0.0
        %694 = vmatprep.subr.mxu0 0.0
        %695 = vmatpush1.msra.mxu0 0.0
        %696 = vmatprep.subr.mxu0 0.0
        %697 = vmatpush1.msra.mxu0 0.0
        %698 = vmatprep.subr.mxu0 0.0
        %699 = vmatpush1.msra.mxu0 0.0
        %700 = vmatprep.subr.mxu0 0.0
        %701 = vmatpush1.msra.mxu0 0.0
        %702 = vmatprep.subr.mxu0 0.0
        %703 = vmatpush1.msra.mxu0 0.0
        %704 = vmatprep.subr.mxu0 0.0
        %705 = vmatpush1.msra.mxu0 0.0
        %706 = vmatprep.subr.mxu0 0.0
        %707 = vmatpush1.msra.mxu0 0.0
        %708 = vmatprep.subr.mxu0 0.0
        %709 = vmatpush1.msra.mxu0 0.0
        %710 = vmatprep.subr.mxu0 0.0
        %711 = vmatpush1.msra.mxu0 0.0
        %712 = vmatprep.subr.mxu0 0.0
        %713 = vmatpush1.msra.mxu0 0.0
        %714 = vmatprep.subr.mxu0 0.0
        %715 = vmatpush1.msra.mxu0 0.0
        %716 = vmatprep.subr.mxu0 0.0
        %717 = vmatpush1.msra.mxu0 0.0
        %718 = vmatprep.mubr.f32.mxu0 0.0
        %719 = vmatmul.mubr.f32.gmra.mrb[0].mxu0 %v630
        %v720 = vpop.f32.mrb[0].mxu0
        %v721 = vadd.f32 %v652, %v720
        %v722 = vpop.f32.mrb[0].mxu0
        %723 = vdwg.mxu0
        %v724 = vld [vmem:[#allocation10] sm:$0xff]
        %v725 = vld [vmem:[#allocation10 + $0x8] sm:$0xff]
        %v726 = vld [vmem:[#allocation10 + $0x10] sm:$0xff]
        %v727 = vld [vmem:[#allocation10 + $0x18] sm:$0xff]
        %v728 = vld [vmem:[#allocation10 + $0x20] sm:$0xff]
        %v729 = vld [vmem:[#allocation10 + $0x28] sm:$0x1]
        %v730 = vld [vmem:[%s8] sm:$0x1]
        %v732 = vlaneseq
        %v733 = vshrl.u32 %v732, 7
        %v734 = vsub.s32 0, %v733
        %v735 = vrot.slane %v730, %v734
        %v738 = vsel %vm462, %v729, 0
        %740 = vmatprep.subr.mxu0 0.0
        %741 = vmatpush1.msra.mxu0 %v724
        %742 = vmatprep.subr.mxu0 0.0
        %743 = vmatpush1.msra.mxu0 %v725
        %744 = vmatprep.subr.mxu0 0.0
        %745 = vmatpush1.msra.mxu0 %v726
        %746 = vmatprep.subr.mxu0 0.0
        %747 = vmatpush1.msra.mxu0 %v727
        %748 = vmatprep.subr.mxu0 0.0
        %749 = vmatpush1.msra.mxu0 %v728
        %750 = vmatprep.subr.mxu0 0.0
        %751 = vmatpush1.msra.mxu0 %v738
        %752 = vmatprep.subr.mxu0 0.0
        %753 = vmatpush1.msra.mxu0 0.0
        %754 = vmatprep.subr.mxu0 0.0
        %755 = vmatpush1.msra.mxu0 0.0
        %756 = vmatprep.subr.mxu0 0.0
        %757 = vmatpush1.msra.mxu0 0.0
        %758 = vmatprep.subr.mxu0 0.0
        %759 = vmatpush1.msra.mxu0 0.0
        %760 = vmatprep.subr.mxu0 0.0
        %761 = vmatpush1.msra.mxu0 0.0
        %762 = vmatprep.subr.mxu0 0.0
        %763 = vmatpush1.msra.mxu0 0.0
        %764 = vmatprep.subr.mxu0 0.0
        %765 = vmatpush1.msra.mxu0 0.0
        %766 = vmatprep.subr.mxu0 0.0
        %767 = vmatpush1.msra.mxu0 0.0
        %768 = vmatprep.subr.mxu0 0.0
        %769 = vmatpush1.msra.mxu0 0.0
        %770 = vmatprep.subr.mxu0 0.0
        %771 = vmatpush1.msra.mxu0 0.0
        %772 = vmatprep.subr.mxu0 0.0
        %773 = vmatpush1.msra.mxu0 0.0
        %774 = vmatprep.subr.mxu0 0.0
        %775 = vmatpush1.msra.mxu0 0.0
        %776 = vmatprep.subr.mxu0 0.0
        %777 = vmatpush1.msra.mxu0 0.0
        %778 = vmatprep.subr.mxu0 0.0
        %779 = vmatpush1.msra.mxu0 0.0
        %780 = vmatprep.subr.mxu0 0.0
        %781 = vmatpush1.msra.mxu0 0.0
        %782 = vmatprep.subr.mxu0 0.0
        %783 = vmatpush1.msra.mxu0 0.0
        %784 = vmatprep.subr.mxu0 0.0
        %785 = vmatpush1.msra.mxu0 0.0
        %786 = vmatprep.subr.mxu0 0.0
        %787 = vmatpush1.msra.mxu0 0.0
        %788 = vmatprep.subr.mxu0 0.0
        %789 = vmatpush1.msra.mxu0 0.0
        %790 = vmatprep.subr.mxu0 0.0
        %791 = vmatpush1.msra.mxu0 0.0
        %792 = vmatprep.subr.mxu0 0.0
        %793 = vmatpush1.msra.mxu0 0.0
        %794 = vmatprep.subr.mxu0 0.0
        %795 = vmatpush1.msra.mxu0 0.0
        %796 = vmatprep.subr.mxu0 0.0
        %797 = vmatpush1.msra.mxu0 0.0
        %798 = vmatprep.subr.mxu0 0.0
        %799 = vmatpush1.msra.mxu0 0.0
        %800 = vmatprep.subr.mxu0 0.0
        %801 = vmatpush1.msra.mxu0 0.0
        %802 = vmatprep.subr.mxu0 0.0
        %803 = vmatpush1.msra.mxu0 0.0
        %804 = vmatprep.mubr.f32.mxu0 0.0
        %805 = vmatmul.mubr.f32.gmra.mrb[0].mxu0 %v460
        %v806 = vpop.f32.mrb[0].mxu0
        %v807 = vadd.f32 %v735, %v806
        %v808 = vpop.f32.mrb[0].mxu0
        %809 = vdwg.mxu0
        %810 = vst [vmem:[%s436] sm:$0xff] %v721
        %811 = vst [vmem:[%s443] sm:$0xff] %v807
        %s812 = sand.u32 %s235, 1
        %s813 = scalar_lea.sflag [#allocation4], %s812
        %s814 = sand.u32 %s235, 1
        %s815 = smul.addr %s814, 8
        %s816 = scalar_lea.vmem [#allocation11], %s815
        %s817 = sand.u32 %s261, 1
        %s818 = scalar_lea.sflag [#allocation13], %s817
        %s819 = sand.u32 %s261, 1
        %s820 = smul.addr %s819, 8
        %s821 = scalar_lea.vmem [#allocation12], %s820
        // Predicated region
        $region77: #{tpu_custom_call.1} parent=55 // pred_check
          %p822 = pneg %p245
        $region78: #{tpu_custom_call.1} parent=55 // pred_check_branch
          %824 = sbr.rel (%p822) target = $region80
        $region79: #{tpu_custom_call.1} parent=55 // pred_region
          %s826 = ssub.s32 128, 128
          %827 = vsyncadd %s813, %s826
          %s828 = smul.addr %s33, 128
          %s829 = scalar_lea.hbm %s9, %s828
          %s831 = sshll.u32 %s816, 4
          %s832 = int_to_ptr.vmem [resolvable:$true] %s831
          %834 = dma.vmem_to_hbm [thread:$0]  %s832, 128, %s829, %s813
        $region80: #{tpu_custom_call.1} parent=55 // pred_fallthru
          _
        // Predicated region
        $region81: #{tpu_custom_call.1} parent=55 // pred_check
          %p835 = pneg %p271
        $region82: #{tpu_custom_call.1} parent=55 // pred_check_branch
          %837 = sbr.rel (%p835) target = $region84
        $region83: #{tpu_custom_call.1} parent=55 // pred_region
          %s839 = ssub.s32 128, 128
          %840 = vsyncadd %s818, %s839
          %s841 = smul.addr %s33, 128
          %s842 = scalar_lea.hbm %s10, %s841
          %s844 = sshll.u32 %s821, 4
          %s845 = int_to_ptr.vmem [resolvable:$true] %s844
          %847 = dma.vmem_to_hbm [thread:$0]  %s845, 128, %s842, %s818
        $region84: #{tpu_custom_call.1} parent=55 // pred_fallthru
          _
      $region56: #{tpu_custom_call.1} parent=5 // pred_fallthru
        _
      %p848 = scmp.le.s32.totalorder 2, %s28
      // Predicated region
      $region85: #{tpu_custom_call.1} parent=5 // pred_check
        %p849 = pneg %p848
      $region86: #{tpu_custom_call.1} parent=5 // pred_check_branch
        %851 = sbr.rel (%p849) target = $region88
      $region87: #{tpu_custom_call.1} parent=5 // pred_region
        %s852 = ssub.s32 %s28, 2
        // Predicated region
        $region89: #{tpu_custom_call.1} parent=87 // pred_check
          %p853 = pneg %p251
        $region90: #{tpu_custom_call.1} parent=87 // pred_check_branch
          %855 = sbr.rel (%p853) target = $region92
        $region91: #{tpu_custom_call.1} parent=87 // pred_region
          %s856 = sand.u32 %s236, 1
          %s857 = scalar_lea.sflag [#allocation4], %s856
          %s858 = sand.u32 %s236, 1
          %s859 = smul.addr %s858, 8
          %s860 = scalar_lea.vmem [#allocation11], %s859
          %861 = dma.done %s857, 128
        $region92: #{tpu_custom_call.1} parent=87 // pred_fallthru
          _
        // Predicated region
        $region93: #{tpu_custom_call.1} parent=87 // pred_check
          %p862 = pneg %p277
        $region94: #{tpu_custom_call.1} parent=87 // pred_check_branch
          %864 = sbr.rel (%p862) target = $region96
        $region95: #{tpu_custom_call.1} parent=87 // pred_region
          %s865 = sand.u32 %s262, 1
          %s866 = scalar_lea.sflag [#allocation13], %s865
          %s867 = sand.u32 %s262, 1
          %s868 = smul.addr %s867, 8
          %s869 = scalar_lea.vmem [#allocation12], %s868
          %870 = dma.done %s866, 128
        $region96: #{tpu_custom_call.1} parent=87 // pred_fallthru
          _
      $region88: #{tpu_custom_call.1} parent=5 // pred_fallthru
        _
    $region6: #{tpu_custom_call.1} parent=1 // loop_footer
      %s32 = sadd.s32 1, %s28
    $region7: #{tpu_custom_call.1} parent=1 // loop_footer_branch
      %27 = sbr.rel target = $region3
    $region8: #{tpu_custom_call.1} parent=1 // loop_exit
      _
    %871 = vsyncpa [#allocation3], 1
    %s872 = scalar_lea.sflag [#allocation3], 1
    %873 = vsyncpa %s872, 1
    %874 = vsyncpa [#allocation6], 1
    %875 = vsyncpa [#allocation9], 1
    %876 = vsyncpa [#allocation4], 1
    %s877 = scalar_lea.sflag [#allocation4], 1
    %878 = vsyncpa %s877, 1
    %879 = vsyncpa [#allocation13], 1
    %s880 = scalar_lea.sflag [#allocation13], 1
    %881 = vsyncpa %s880, 1

</llo_original>
